<compile_context>
chip_gen: v5e
topology: v5e:2x2
jax: 0.10.0
libtpu: 0.0.40
codegen_flags: <defaults>
</compile_context>

<pallas_src>
import jax
import jax.numpy as jnp
from jax.experimental import pallas as pl
from jax.experimental.pallas import tpu as pltpu

LANE = 128          # f32 lane granule
TB_MAX = 8192       # batch-tile cap; x tile is TB*8*4 B = 256 KiB, VMEM-safe


def _round_up(n, m):
    return ((n + m - 1) // m) * m


def mlp_kernel(xT_ref, w1_ref, b1_ref, w2_ref, b2_ref, w3_ref, b3_ref, o_ref):
    # xT_ref: (8, TB)   w1: (64, 8)   b1: (64, 1)
    # w2: (32, 64)      b2: (32, 1)
    # w3: (32, 1) column, b3: (1, 1)  o_ref: (1, TB)
    xT = xT_ref[...]

    h1 = jnp.dot(w1_ref[...], xT, preferred_element_type=jnp.float32) + b1_ref[...]
    h1 = jnp.maximum(h1, 0.0)                                   # (64, TB)

    h2 = jnp.dot(w2_ref[...], h1, preferred_element_type=jnp.float32) + b2_ref[...]
    h2 = jnp.maximum(h2, 0.0)                                   # (32, TB)

    # Last layer: N=1 matmul replaced by VPU multiply + sublane reduction (XLU).
    h3 = jnp.sum(h2 * w3_ref[...], axis=0, keepdims=True) + b3_ref[...]  # (1, TB)

    o_ref[...] = h3.astype(o_ref.dtype)


@jax.jit
def mlp_regressor(x, params):
    """x: (B, 8) float32 (PyTorch layout).  Returns (B, 1) float32."""
    B, F = x.shape
    assert F == 8

    w1, b1 = params["w1"], params["b1"]   # (64, 8), (64, 1)
    w2, b2 = params["w2"], params["b2"]   # (32, 64), (32, 1)
    w3, b3 = params["w3"], params["b3"]   # (32, 1),  (1, 1)

    # Choose the number of tiles first, then the smallest lane-aligned tile
    # that covers B, so padding waste is bounded by one 128-lane granule/tile.
    num_tiles = -(-B // TB_MAX)
    tb = _round_up(-(-B // num_tiles), LANE)
    B_pad = num_tiles * tb

    # Flip to (features, batch) so the batch lives on the lane axis, then pad
    # the lane axis; under jit this is a single cheap layout fusion.
    xT = jnp.pad(x.astype(jnp.float32).T, ((0, 0), (0, B_pad - B)))  # (8, B_pad)

    resident = lambda shape: pl.BlockSpec(shape, lambda i: (0, 0))

    cost = pl.CostEstimate(
        flops=2 * B_pad * (8 * 64 + 64 * 32 + 32 * 1),
        transcendentals=0,
        bytes_accessed=4 * (B_pad * 8 + B_pad * 1
                            + 64 * 8 + 64 + 32 * 64 + 32 + 32 + 1),
    )

    outT = pl.pallas_call(
        mlp_kernel,
        out_shape=jax.ShapeDtypeStruct((1, B_pad), jnp.float32),
        grid=(num_tiles,),
        in_specs=[
            pl.BlockSpec((8, tb), lambda i: (0, i)),    # x tile streams
            resident(w1.shape), resident(b1.shape),     # weights stay in VMEM
            resident(w2.shape), resident(b2.shape),
            resident(w3.shape), resident(b3.shape),
        ],
        out_specs=pl.BlockSpec((1, tb), lambda i: (0, i)),      # lane-dense store
        compiler_params=pltpu.CompilerParams(
            dimension_semantics=("parallel",),          # both v7x TCs
        ),
        cost_estimate=cost,
    )(xT, w1, b1, w2, b2, w3, b3)

    return outT[:, :B].T                                        # (B, 1)


def init_params(key):
    """PyTorch-style (out_features, in_features) layout, biases as columns."""
    k1, k2, k3, k4, k5, k6 = jax.random.split(key, 6)

    def uniform(k, shape, fan_in):
        bound = 1.0 / (fan_in ** 0.5)
        return jax.random.uniform(k, shape, jnp.float32, -bound, bound)

    return {
        "w1": uniform(k1, (64, 8), 8),
        "b1": uniform(k2, (64, 1), 8),
        "w2": uniform(k3, (32, 64), 64),
        "b2": uniform(k4, (32, 1), 64),
        "w3": uniform(k5, (32, 1), 32),   # stored as a column (in, 1)
        "b3": uniform(k6, (1, 1), 32),
    }


def mlp_reference(x, p):
    h1 = jnp.maximum(x @ p["w1"].T + p["b1"].T, 0.0)
    h2 = jnp.maximum(h1 @ p["w2"].T + p["b2"].T, 0.0)
    return h2 @ p["w3"] + p["b3"]


if __name__ == "__main__":
    key = jax.random.PRNGKey(0)
    kx, kp = jax.random.split(key)

    B = 8
    x = jax.random.normal(kx, (B, 8), jnp.float32)
    params = init_params(kp)

    out = mlp_regressor(x, params)
    out = jax.block_until_ready(out)

    ref = mlp_reference(x, params)
    assert out.shape == (B, 1), out.shape
    assert jnp.allclose(out, ref, atol=1e-5, rtol=1e-5), "mismatch vs reference"

    print("KERNEL_OK")
</pallas_src>

<mosaic_0001>
module attributes {stable_mosaic.version = 11 : i64} {
  func.func @mlp_kernel(%arg0: i32, %arg1: memref<8x128xf32, #tpu.memory_space<vmem>>, %arg2: memref<64x8xf32, #tpu.memory_space<vmem>>, %arg3: memref<64x1xf32, #tpu.memory_space<vmem>>, %arg4: memref<32x64xf32, #tpu.memory_space<vmem>>, %arg5: memref<32x1xf32, #tpu.memory_space<vmem>>, %arg6: memref<32x1xf32, #tpu.memory_space<vmem>>, %arg7: memref<1x1xf32, #tpu.memory_space<vmem>>, %arg8: memref<1x128xf32, #tpu.memory_space<vmem>>) attributes {dimension_semantics = [#tpu.dimension_semantics<parallel>], iteration_bounds = array<i64: 1>, scalar_prefetch = 0 : i64, scratch_operands = 0 : i64, tpu.core_type = #tpu.core_type<tc>, window_params = [{transform_indices = @transform_0, window_bounds = array<i64: 8, 128>}, {pipeline_mode = #tpu.pipeline_mode<synchronous>, transform_indices = @transform_1, window_bounds = array<i64: 64, 8>}, {pipeline_mode = #tpu.pipeline_mode<synchronous>, transform_indices = @transform_2, window_bounds = array<i64: 64, 1>}, {pipeline_mode = #tpu.pipeline_mode<synchronous>, transform_indices = @transform_3, window_bounds = array<i64: 32, 64>}, {pipeline_mode = #tpu.pipeline_mode<synchronous>, transform_indices = @transform_4, window_bounds = array<i64: 32, 1>}, {pipeline_mode = #tpu.pipeline_mode<synchronous>, transform_indices = @transform_5, window_bounds = array<i64: 32, 1>}, {pipeline_mode = #tpu.pipeline_mode<synchronous>, transform_indices = @transform_6, window_bounds = array<i64: 1, 1>}, {transform_indices = @transform_7, window_bounds = array<i64: 1, 128>}]} {
    %c0 = arith.constant 0 : index
    %c0_0 = arith.constant 0 : index
    %0 = vector.load %arg1[%c0, %c0_0] : memref<8x128xf32, #tpu.memory_space<vmem>>, vector<8x128xf32>
    %c0_1 = arith.constant 0 : index
    %c0_2 = arith.constant 0 : index
    %1 = vector.load %arg2[%c0_1, %c0_2] : memref<64x8xf32, #tpu.memory_space<vmem>>, vector<64x8xf32>
    %cst = arith.constant dense<0.000000e+00> : vector<64x128xf32>
    %2 = tpu.matmul %1, %0, %cst {dimension_numbers = #tpu.dot_dimension_numbers<[1], [0], [0], [1], [0, 0, 1, 1], [], []>} : vector<64x8xf32>, vector<8x128xf32>, vector<64x128xf32> -> vector<64x128xf32>
    %c0_3 = arith.constant 0 : index
    %c0_4 = arith.constant 0 : index
    %3 = vector.load %arg3[%c0_3, %c0_4] : memref<64x1xf32, #tpu.memory_space<vmem>>, vector<64x1xf32>
    %4 = vector.broadcast %3 : vector<64x1xf32> to vector<64x128xf32>
    %5 = arith.addf %2, %4 : vector<64x128xf32>
    %cst_5 = arith.constant 0.000000e+00 : f32
    %6 = vector.broadcast %cst_5 : f32 to vector<64x128xf32>
    %7 = arith.maximumf %5, %6 : vector<64x128xf32>
    %c0_6 = arith.constant 0 : index
    %c0_7 = arith.constant 0 : index
    %8 = vector.load %arg4[%c0_6, %c0_7] : memref<32x64xf32, #tpu.memory_space<vmem>>, vector<32x64xf32>
    %cst_8 = arith.constant dense<0.000000e+00> : vector<32x128xf32>
    %9 = tpu.matmul %8, %7, %cst_8 {dimension_numbers = #tpu.dot_dimension_numbers<[1], [0], [0], [1], [0, 0, 1, 1], [], []>} : vector<32x64xf32>, vector<64x128xf32>, vector<32x128xf32> -> vector<32x128xf32>
    %c0_9 = arith.constant 0 : index
    %c0_10 = arith.constant 0 : index
    %10 = vector.load %arg5[%c0_9, %c0_10] : memref<32x1xf32, #tpu.memory_space<vmem>>, vector<32x1xf32>
    %11 = vector.broadcast %10 : vector<32x1xf32> to vector<32x128xf32>
    %12 = arith.addf %9, %11 : vector<32x128xf32>
    %cst_11 = arith.constant 0.000000e+00 : f32
    %13 = vector.broadcast %cst_11 : f32 to vector<32x128xf32>
    %14 = arith.maximumf %12, %13 : vector<32x128xf32>
    %c0_12 = arith.constant 0 : index
    %c0_13 = arith.constant 0 : index
    %15 = vector.load %arg6[%c0_12, %c0_13] : memref<32x1xf32, #tpu.memory_space<vmem>>, vector<32x1xf32>
    %16 = vector.broadcast %15 : vector<32x1xf32> to vector<32x128xf32>
    %17 = arith.mulf %14, %16 : vector<32x128xf32>
    %cst_14 = arith.constant dense<0.000000e+00> : vector<128xf32>
    %18 = vector.multi_reduction <add>, %17, %cst_14 [0] : vector<32x128xf32> to vector<128xf32>
    %19 = vector.shape_cast %18 : vector<128xf32> to vector<1x128xf32>
    %c0_15 = arith.constant 0 : index
    %c0_16 = arith.constant 0 : index
    %20 = vector.load %arg7[%c0_15, %c0_16] : memref<1x1xf32, #tpu.memory_space<vmem>>, vector<1x1xf32>
    %21 = vector.broadcast %20 : vector<1x1xf32> to vector<1x128xf32>
    %22 = arith.addf %19, %21 : vector<1x128xf32>
    %c0_17 = arith.constant 0 : index
    %c0_18 = arith.constant 0 : index
    %23 = vector.load %arg8[%c0_17, %c0_18] : memref<1x128xf32, #tpu.memory_space<vmem>>, vector<1x128xf32>
    tpu.vector_store %arg8[%c0_17, %c0_18], %22 {strides = array<i32>} : memref<1x128xf32, #tpu.memory_space<vmem>>, vector<1x128xf32>,
    return
  }
  func.func @transform_0(%arg0: i32) -> (i32, i32) {
    %c0_i32 = arith.constant 0 : i32
    %c0_i32_0 = arith.constant 0 : i32
    return %c0_i32, %arg0 : i32, i32
  }
  func.func @transform_1(%arg0: i32) -> (i32, i32) {
    %c0_i32 = arith.constant 0 : i32
    %c0_i32_0 = arith.constant 0 : i32
    %c0_i32_1 = arith.constant 0 : i32
    return %c0_i32, %c0_i32_0 : i32, i32
  }
  func.func @transform_2(%arg0: i32) -> (i32, i32) {
    %c0_i32 = arith.constant 0 : i32
    %c0_i32_0 = arith.constant 0 : i32
    %c0_i32_1 = arith.constant 0 : i32
    return %c0_i32, %c0_i32_0 : i32, i32
  }
  func.func @transform_3(%arg0: i32) -> (i32, i32) {
    %c0_i32 = arith.constant 0 : i32
    %c0_i32_0 = arith.constant 0 : i32
    %c0_i32_1 = arith.constant 0 : i32
    return %c0_i32, %c0_i32_0 : i32, i32
  }
  func.func @transform_4(%arg0: i32) -> (i32, i32) {
    %c0_i32 = arith.constant 0 : i32
    %c0_i32_0 = arith.constant 0 : i32
    %c0_i32_1 = arith.constant 0 : i32
    return %c0_i32, %c0_i32_0 : i32, i32
  }
  func.func @transform_5(%arg0: i32) -> (i32, i32) {
    %c0_i32 = arith.constant 0 : i32
    %c0_i32_0 = arith.constant 0 : i32
    %c0_i32_1 = arith.constant 0 : i32
    return %c0_i32, %c0_i32_0 : i32, i32
  }
  func.func @transform_6(%arg0: i32) -> (i32, i32) {
    %c0_i32 = arith.constant 0 : i32
    %c0_i32_0 = arith.constant 0 : i32
    %c0_i32_1 = arith.constant 0 : i32
    return %c0_i32, %c0_i32_0 : i32, i32
  }
  func.func @transform_7(%arg0: i32) -> (i32, i32) {
    %c0_i32 = arith.constant 0 : i32
    %c0_i32_0 = arith.constant 0 : i32
    return %c0_i32, %arg0 : i32, i32
  }
}

</mosaic_0001>

<llo_original>
// kernel: mlp_regressor.1
$region0: #{mlp_regressor.1}
  #allocation0 [shape = 'u32[]', space=smem, size = 0x4, offset = 0x4, fixed_abs, tag = 'smem constant byte address 0x4 - core index']
  #allocation1 [shape = 'u32[72,128]{1,0:T(1,128)}', space=vmem, size = 0x9000, scoped, tag = 'internal scratch']
  #allocation2 [shape = 'f32[1,1]{1,0:T(1,128)S(1)}', space=vmem, size = 0x200, scoped, tag = 'scoped memory for mlp_regressor.1']
  %s0 = inlined_call_operand.vmem [shape: f32[8,128], index: 0, kind: input, shape index: {}]
  %s1 = inlined_call_operand.vmem [shape: f32[64,8], index: 1, kind: input, shape index: {}]
  %s2 = inlined_call_operand.vmem [shape: f32[64,1], index: 2, kind: input, shape index: {}]
  %s3 = inlined_call_operand.vmem [shape: f32[32,64], index: 3, kind: input, shape index: {}]
  %s4 = inlined_call_operand.vmem [shape: f32[32,1], index: 4, kind: input, shape index: {}]
  %s5 = inlined_call_operand.vmem [shape: f32[32,1], index: 5, kind: input, shape index: {}]
  %s6 = inlined_call_operand.<no memory space> [shape: f32[1,1], index: 6, kind: input, shape index: {}]
  %s7 = inlined_call_operand.vmem [shape: f32[1,128], index: 7, kind: output, shape index: {}]
  %s8 = sld [smem:[#allocation0]]
  $region38: #{mlp_regressor.1} parent=0
    _
  %s10 = ssub.s32 1, %s8
  %s11 = scalar_select 0, %s10, %s8
  %v12 = vstv %s6
  %13 = vst [vmem:[#allocation2] sm:$0x1] %v12
  // Predicated region
  $region2: #{mlp_regressor.1} parent=0 // pred_check
    _
  $region3: #{mlp_regressor.1} parent=0 // pred_check_branch
    %15 = sbr.rel (0) target = $region5
  $region4: #{mlp_regressor.1} parent=0 // pred_region
    _
  $region5: #{mlp_regressor.1} parent=0 // pred_fallthru
    _
  // Predicated region
  $region6: #{mlp_regressor.1} parent=0 // pred_check
    _
  $region7: #{mlp_regressor.1} parent=0 // pred_check_branch
    %17 = sbr.rel (0) target = $region9
  $region8: #{mlp_regressor.1} parent=0 // pred_region
    _
  $region9: #{mlp_regressor.1} parent=0 // pred_fallthru
    _
  // Predicated region
  $region10: #{mlp_regressor.1} parent=0 // pred_check
    _
  $region11: #{mlp_regressor.1} parent=0 // pred_check_branch
    %19 = sbr.rel (0) target = $region13
  $region12: #{mlp_regressor.1} parent=0 // pred_region
    _
  $region13: #{mlp_regressor.1} parent=0 // pred_fallthru
    _
  // Predicated region
  $region14: #{mlp_regressor.1} parent=0 // pred_check
    _
  $region15: #{mlp_regressor.1} parent=0 // pred_check_branch
    %21 = sbr.rel (0) target = $region17
  $region16: #{mlp_regressor.1} parent=0 // pred_region
    _
  $region17: #{mlp_regressor.1} parent=0 // pred_fallthru
    _
  // Predicated region
  $region18: #{mlp_regressor.1} parent=0 // pred_check
    _
  $region19: #{mlp_regressor.1} parent=0 // pred_check_branch
    %23 = sbr.rel (0) target = $region21
  $region20: #{mlp_regressor.1} parent=0 // pred_region
    _
  $region21: #{mlp_regressor.1} parent=0 // pred_fallthru
    _
  // Predicated region
  $region22: #{mlp_regressor.1} parent=0 // pred_check
    _
  $region23: #{mlp_regressor.1} parent=0 // pred_check_branch
    %25 = sbr.rel (0) target = $region25
  $region24: #{mlp_regressor.1} parent=0 // pred_region
    _
  $region25: #{mlp_regressor.1} parent=0 // pred_fallthru
    _
  // Predicated region
  $region26: #{mlp_regressor.1} parent=0 // pred_check
    _
  $region27: #{mlp_regressor.1} parent=0 // pred_check_branch
    %27 = sbr.rel (0) target = $region29
  $region28: #{mlp_regressor.1} parent=0 // pred_region
    _
  $region29: #{mlp_regressor.1} parent=0 // pred_fallthru
    _
  %v28 = vld [vmem:[%s0] sm:$0xff]
  %v29 = vld [vmem:[%s1] sm:$0xff]
  %v30 = vld [vmem:[%s1 + $0x8] sm:$0xff]
  %v31 = vld [vmem:[%s1 + $0x10] sm:$0xff]
  %v32 = vld [vmem:[%s1 + $0x18] sm:$0xff]
  %v33 = vld [vmem:[%s1 + $0x20] sm:$0xff]
  %v34 = vld [vmem:[%s1 + $0x28] sm:$0xff]
  %v35 = vld [vmem:[%s1 + $0x30] sm:$0xff]
  %v36 = vld [vmem:[%s1 + $0x38] sm:$0xff]
  %v37 = vld [vmem:[%s2] sm:$0xff]
  %v38 = vld [vmem:[%s2 + $0x8] sm:$0xff]
  %v39 = vld [vmem:[%s2 + $0x10] sm:$0xff]
  %v40 = vld [vmem:[%s2 + $0x18] sm:$0xff]
  %v41 = vld [vmem:[%s2 + $0x20] sm:$0xff]
  %v42 = vld [vmem:[%s2 + $0x28] sm:$0xff]
  %v43 = vld [vmem:[%s2 + $0x30] sm:$0xff]
  %v44 = vld [vmem:[%s2 + $0x38] sm:$0xff]
  %46 = vset.pattern.permute.xlu0 0
  %47 = vperm.xlu0 %46, %v37
  %v48 = vpop.permute.xlu0 %47
  %51 = vset.pattern.permute.xlu0 0
  %52 = vperm.xlu0 %51, %v38
  %v53 = vpop.permute.xlu0 %52
  %56 = vset.pattern.permute.xlu0 0
  %57 = vperm.xlu0 %56, %v39
  %v58 = vpop.permute.xlu0 %57
  %61 = vset.pattern.permute.xlu0 0
  %62 = vperm.xlu0 %61, %v40
  %v63 = vpop.permute.xlu0 %62
  %66 = vset.pattern.permute.xlu0 0
  %67 = vperm.xlu0 %66, %v41
  %v68 = vpop.permute.xlu0 %67
  %71 = vset.pattern.permute.xlu0 0
  %72 = vperm.xlu0 %71, %v42
  %v73 = vpop.permute.xlu0 %72
  %76 = vset.pattern.permute.xlu0 0
  %77 = vperm.xlu0 %76, %v43
  %v78 = vpop.permute.xlu0 %77
  %81 = vset.pattern.permute.xlu0 0
  %82 = vperm.xlu0 %81, %v44
  %v83 = vpop.permute.xlu0 %82
  %vm85 = vcmask 64512
  %v87 = vsel %vm85, %v29, 0
  %v90 = vsel %vm85, %v30, 0
  %v93 = vsel %vm85, %v31, 0
  %v96 = vsel %vm85, %v32, 0
  %v99 = vsel %vm85, %v33, 0
  %v102 = vsel %vm85, %v34, 0
  %v105 = vsel %vm85, %v35, 0
  %v108 = vsel %vm85, %v36, 0
  %110 = vmatpush.msra.mxu0 0.0
  %111 = vmatpush.msra.mxu0 0.0
  %112 = vmatpush.msra.mxu0 0.0
  %113 = vmatpush.msra.mxu0 0.0
  %114 = vmatpush.msra.mxu0 0.0
  %115 = vmatpush.msra.mxu0 0.0
  %116 = vmatpush.msra.mxu0 0.0
  %117 = vmatpush.msra.mxu0 0.0
  %118 = vmatpush.msra.mxu0 0.0
  %119 = vmatpush.msra.mxu0 0.0
  %120 = vmatpush.msra.mxu0 0.0
  %121 = vmatpush.msra.mxu0 0.0
  %122 = vmatpush.msra.mxu0 0.0
  %123 = vmatpush.msra.mxu0 0.0
  %124 = vmatpush.msra.mxu0 0.0
  %125 = vmatpush.msra.mxu0 %v28
  %126 = vmatmul.f32.gmra.mxu0 %v87
  %v127 = vpop.f32.mrf.mxu0
  %v128 = vadd.f32 %v48, %v127
  %129 = vmatmul.f32.gmra.mxu0 %v90
  %v130 = vpop.f32.mrf.mxu0
  %v131 = vadd.f32 %v53, %v130
  %132 = vmatmul.f32.gmra.mxu0 %v93
  %v133 = vpop.f32.mrf.mxu0
  %v134 = vadd.f32 %v58, %v133
  %135 = vmatmul.f32.gmra.mxu0 %v96
  %v136 = vpop.f32.mrf.mxu0
  %v137 = vadd.f32 %v63, %v136
  %138 = vmatmul.f32.gmra.mxu0 %v99
  %v139 = vpop.f32.mrf.mxu0
  %v140 = vadd.f32 %v68, %v139
  %141 = vmatmul.f32.gmra.mxu0 %v102
  %v142 = vpop.f32.mrf.mxu0
  %v143 = vadd.f32 %v73, %v142
  %144 = vmatmul.f32.gmra.mxu0 %v105
  %v145 = vpop.f32.mrf.mxu0
  %v146 = vadd.f32 %v78, %v145
  %147 = vmatmul.f32.gmra.mxu0 %v108
  %v148 = vpop.f32.mrf.mxu0
  %v149 = vadd.f32 %v83, %v148
  %150 = vdwg.mxu0
  %v151 = vmax.f32 %v128, 0.0
  %v152 = vmax.f32 %v131, 0.0
  %v153 = vmax.f32 %v134, 0.0
  %v154 = vmax.f32 %v137, 0.0
  %v155 = vmax.f32 %v140, 0.0
  %v156 = vmax.f32 %v143, 0.0
  %v157 = vmax.f32 %v146, 0.0
  %v158 = vmax.f32 %v149, 0.0
  %v159 = vld [vmem:[%s3] sm:$0xff]
  %v160 = vld [vmem:[%s3 + $0x8] sm:$0xff]
  %v161 = vld [vmem:[%s3 + $0x10] sm:$0xff]
  %v162 = vld [vmem:[%s3 + $0x18] sm:$0xff]
  %v163 = vld [vmem:[%s4] sm:$0xff]
  %v164 = vld [vmem:[%s4 + $0x8] sm:$0xff]
  %v165 = vld [vmem:[%s4 + $0x10] sm:$0xff]
  %v166 = vld [vmem:[%s4 + $0x18] sm:$0xff]
  %168 = vset.pattern.permute.xlu0 0
  %169 = vperm.xlu0 %168, %v163
  %v170 = vpop.permute.xlu0 %169
  %173 = vset.pattern.permute.xlu0 0
  %174 = vperm.xlu0 %173, %v164
  %v175 = vpop.permute.xlu0 %174
  %178 = vset.pattern.permute.xlu0 0
  %179 = vperm.xlu0 %178, %v165
  %v180 = vpop.permute.xlu0 %179
  %183 = vset.pattern.permute.xlu0 0
  %184 = vperm.xlu0 %183, %v166
  %v185 = vpop.permute.xlu0 %184
  %vm187 = vcmask 523264
  %v189 = vsel %vm187, %v159, 0
  %v192 = vsel %vm187, %v160, 0
  %v195 = vsel %vm187, %v161, 0
  %v198 = vsel %vm187, %v162, 0
  %200 = vmatpush.msra.mxu0 0.0
  %201 = vmatpush.msra.mxu0 0.0
  %202 = vmatpush.msra.mxu0 0.0
  %203 = vmatpush.msra.mxu0 0.0
  %204 = vmatpush.msra.mxu0 0.0
  %205 = vmatpush.msra.mxu0 0.0
  %206 = vmatpush.msra.mxu0 0.0
  %207 = vmatpush.msra.mxu0 0.0
  %208 = vmatpush.msra.mxu0 %v158
  %209 = vmatpush.msra.mxu0 %v157
  %210 = vmatpush.msra.mxu0 %v156
  %211 = vmatpush.msra.mxu0 %v155
  %212 = vmatpush.msra.mxu0 %v154
  %213 = vmatpush.msra.mxu0 %v153
  %214 = vmatpush.msra.mxu0 %v152
  %215 = vmatpush.msra.mxu0 %v151
  %216 = vmatmul.f32.gmra.mxu0 %v189
  %v217 = vpop.f32.mrf.mxu0
  %v218 = vadd.f32 %v170, %v217
  %219 = vmatmul.f32.gmra.mxu0 %v192
  %v220 = vpop.f32.mrf.mxu0
  %v221 = vadd.f32 %v175, %v220
  %222 = vmatmul.f32.gmra.mxu0 %v195
  %v223 = vpop.f32.mrf.mxu0
  %v224 = vadd.f32 %v180, %v223
  %225 = vmatmul.f32.gmra.mxu0 %v198
  %v226 = vpop.f32.mrf.mxu0
  %v227 = vadd.f32 %v185, %v226
  %228 = vdwg.mxu0
  %v229 = vmax.f32 %v218, 0.0
  %v230 = vmax.f32 %v221, 0.0
  %v231 = vmax.f32 %v224, 0.0
  %v232 = vmax.f32 %v227, 0.0
  %v233 = vld [vmem:[%s5] sm:$0xff]
  %v234 = vld [vmem:[%s5 + $0x8] sm:$0xff]
  %v235 = vld [vmem:[%s5 + $0x10] sm:$0xff]
  %v236 = vld [vmem:[%s5 + $0x18] sm:$0xff]
  %238 = vset.pattern.permute.xlu0 0
  %239 = vperm.xlu0 %238, %v233
  %v240 = vpop.permute.xlu0 %239
  %243 = vset.pattern.permute.xlu0 0
  %244 = vperm.xlu0 %243, %v234
  %v245 = vpop.permute.xlu0 %244
  %248 = vset.pattern.permute.xlu0 0
  %249 = vperm.xlu0 %248, %v235
  %v250 = vpop.permute.xlu0 %249
  %253 = vset.pattern.permute.xlu0 0
  %254 = vperm.xlu0 %253, %v236
  %v255 = vpop.permute.xlu0 %254
  %v257 = vmul.f32 %v229, %v240
  %v258 = vmul.f32 %v230, %v245
  %v259 = vmul.f32 %v231, %v250
  %v260 = vmul.f32 %v232, %v255
  %v261 = vadd.f32 %v257, %v258
  %v262 = vadd.f32 %v261, %v259
  %v263 = vadd.f32 %v262, %v260
  %v264 = vrot.slane %v263, 4
  %v265 = vadd.f32 %v263, %v264
  %v266 = vrot.slane %v265, 2
  %v267 = vadd.f32 %v265, %v266
  %v268 = vrot.slane %v267, 1
  %v269 = vadd.f32 %v267, %v268
  %v270 = vld [vmem:[#allocation2] sm:$0x1]
  %272 = vset.pattern.permute.xlu0 0
  %273 = vperm.xlu0 %272, %v270
  %v274 = vpop.permute.xlu0 %273
  %v276 = vperm.slane %v274, 0
  %v277 = vadd.f32 %v269, %v276
  %278 = vst [vmem:[%s7] sm:$0x1] %v277
  // Predicated region
  $region30: #{mlp_regressor.1} parent=0 // pred_check
    _
  $region31: #{mlp_regressor.1} parent=0 // pred_check_branch
    %280 = sbr.rel (0) target = $region33
  $region32: #{mlp_regressor.1} parent=0 // pred_region
    _
  $region33: #{mlp_regressor.1} parent=0 // pred_fallthru
    _
  // Predicated region
  $region34: #{mlp_regressor.1} parent=0 // pred_check
    _
  $region35: #{mlp_regressor.1} parent=0 // pred_check_branch
    %282 = sbr.rel (0) target = $region37
  $region36: #{mlp_regressor.1} parent=0 // pred_region
    _
  $region37: #{mlp_regressor.1} parent=0 // pred_fallthru
    _

</llo_original>
